<compile_context>
chip_gen: v7x
topology: tpu7x:2x2x1
jax: 0.10.0
libtpu: 0.0.40
codegen_flags: <defaults>
</compile_context>

<pallas_src>
import numpy as np
import jax
import jax.numpy as jnp
from jax.experimental import pallas as pl
from jax.experimental.pallas import tpu as pltpu

EPS_LABEL = 0.001          # eps used inside single_image_loss
ALPHA = 1.0
BETA = 3.0
_LANE = 128
_SUBLANE = 8
_NEG_SENTINEL = -1.0       # pre_loss >= 0, so -1 marks positive-label pixels


# ---------------------------------------------------------------------------
# Pallas kernel: elementwise BCE / masked-MSE hot path + running reductions.
# ---------------------------------------------------------------------------
def _textloss_kernel(p_ref, d_ref, tmask_ref, trmask_ref, dist_ref,
                     neg_ref, cls_ref, cnt_ref, psum_ref,
                     cls_acc, cnt_acc, psum_acc):
    """One block of the flattened pixel axis.

    Grid = (P, steps_per_core); axis 0 is "parallel" (megacore split of the
    pixel axis), axis 1 is "arbitrary" (reduction -> VMEM accumulators,
    finalized on the last step).  Block rank is 2 ([B, TN]) or 3
    ([B, TS, 128]); the body is rank-agnostic.
    """
    j = pl.program_id(1)

    @pl.when(j == 0)
    def _init():
        cls_acc[...] = jnp.zeros_like(cls_acc)
        cnt_acc[...] = jnp.zeros_like(cnt_acc)
        psum_acc[...] = jnp.zeros_like(psum_acc)

    prob = p_ref[...].astype(jnp.float32)        # sigmoid prob, channel 0
    dpred = d_ref[...].astype(jnp.float32)       # distance prediction, channel 1
    tmask = tmask_ref[...].astype(jnp.float32)   # train_mask (any dtype)
    conf = trmask_ref[...] > 0                   # tr_mask > 0
    dist = dist_ref[...].astype(jnp.float32)     # distance_field

    # torch BCELoss(reduce=False) with its log clamp at -100.  conf is {0,1},
    # so a single EUP log suffices:  bce = -max(log(conf ? p : 1-p), -100).
    sel = jnp.where(conf, prob, 1.0 - prob)
    bce = -jnp.maximum(jnp.log(sel), -100.0)

    # torch MSELoss(reduce=False) masked by train_mask -> "pre_loss".
    diff = dpred - dist
    pre = diff * diff * tmask

    pos = dist >= EPS_LABEL
    posf = pos.astype(jnp.float32)

    # Negatives stream for the OHEM glue: pre_loss where label < eps, sentinel
    # elsewhere (pre >= 0, so -1 sorts strictly below every real value).
    neg_ref[...] = jnp.where(pos, jnp.float32(_NEG_SENTINEL), pre)

    # Elementwise running accumulators (pure VALU adds per block).
    cls_acc[...] += bce * tmask
    cnt_acc[...] += posf
    psum_acc[...] += pre * posf

    # Single cross-lane/sublane reduce + narrow stat stores on the last step
    # this core executes.
    @pl.when(j == pl.num_programs(1) - 1)
    def _finalize():
        def _reduce(x):
            for ax in range(x.ndim - 1, 0, -1):
                x = jnp.sum(x, axis=ax, keepdims=True)
            return x
        cls_ref[...] = _reduce(cls_acc[...])
        cnt_ref[...] = _reduce(cnt_acc[...])
        psum_ref[...] = _reduce(psum_acc[...])


# ---------------------------------------------------------------------------
# Generation-aware tiling helpers.
# ---------------------------------------------------------------------------
def _num_tensorcores():
    """TensorCores addressable by one pallas_call (megacore split)."""
    try:
        kind = jax.devices()[0].device_kind.lower().replace(" ", "")
    except Exception:
        return 1
    if "v7" in kind or "tpu7" in kind:   # v7x exposes 2 TCs per chip
        return 2
    return 1                             # v5e / v6e (and safe default): 1 TC


def _vmem_limit_bytes():
    cap = 64 * 1024 * 1024               # conservative default (v7x physical)
    try:
        info = pltpu.get_tpu_info()
        cap = int(getattr(info, "vmem_capacity_bytes", cap) or cap)
    except Exception:
        pass
    # 3/4 of physical, capped at 64 MiB -> 48 MiB on v7x, 64 MiB on v5e/v6e.
    return max(32 * 1024 * 1024, min(cap * 3 // 4, 64 * 1024 * 1024))


def _largest_divisor(n, step, cap):
    """Largest multiple of `step` dividing n and <= cap (assumes n % step == 0)."""
    cap = max(step, min(cap, n))
    best, d = step, step
    while d <= cap:
        if n % d == 0:
            best = d
        d += step
    return best


def _sublane_align(itemsizes):
    """Sublane alignment needed so sub-32-bit input blocks stay tile-aligned."""
    a = _SUBLANE
    for s in itemsizes:
        if s == 2:
            a = max(a, 16)
        elif s == 1:
            a = max(a, 32)
    return a


# ---------------------------------------------------------------------------
# pallas_call wrapper.
# ---------------------------------------------------------------------------
def _run_kernel(fy_preds, tmask, trmask, dist):
    """Returns (neg_masked [B,N] f32, cls_sum scalar, pos_cnt [B], pos_sum [B]).

    neg_masked  = pre_loss where distance_field < eps, sentinel -1 elsewhere.
    cls_sum     = sum over all pixels of BCE * train_mask.
    pos_cnt/sum = per-image positive-pixel count / pre_loss sum.
    """
    B, C, H, W = fy_preds.shape
    N = H * W

    fy_b = jnp.dtype(fy_preds.dtype).itemsize
    tm_b = jnp.dtype(tmask.dtype).itemsize
    trm_b = jnp.dtype(trmask.dtype).itemsize
    di_b = jnp.dtype(dist.dtype).itemsize
    # VMEM bytes per block element: 5 double-buffered input streams,
    # 1 double-buffered f32 output stream, 3 f32 accumulators.
    vmem_per_elem = 2 * (2 * fy_b + tm_b + trm_b + di_b) + 2 * 4 + 3 * 4

    vmem_limit = _vmem_limit_bytes()
    stream_budget = int(vmem_limit * 0.55)    # headroom for stats / semaphores
    n_cores = _num_tensorcores()

    cost = pl.CostEstimate(
        flops=14 * B * N,
        transcendentals=B * N,                                    # one log/elem
        bytes_accessed=B * N * (2 * fy_b + tm_b + trm_b + di_b + 4))

    lane_aligned = (N % _LANE == 0)
    sub_align = _sublane_align((fy_b, tm_b, trm_b, di_b))
    R = N // _LANE if lane_aligned else 0

    if lane_aligned and R % sub_align == 0:
        # ------- fast path: (B, TS, 128) blocks, all sublanes used ----------
        P = n_cores if (n_cores > 1 and R % (sub_align * n_cores) == 0) else 1
        r_core = R // P
        ts_cap = max(sub_align, stream_budget // (B * _LANE * vmem_per_elem))
        TS = _largest_divisor(r_core, sub_align, ts_cap)
        tpc = r_core // TS                    # grid steps per core
        ch_blocks = R // TS                   # row-blocks per fy channel

        fy_rows = fy_preds.reshape(B, C * R, _LANE)   # free reshape, no copies
        tm_rows = tmask.reshape(B, R, _LANE)
        trm_rows = trmask.reshape(B, R, _LANE)
        di_rows = dist.reshape(B, R, _LANE)

        blk = (B, TS, _LANE)
        plane_map = lambda pi, j: (0, pi * tpc + j, 0)
        p_map = plane_map                                        # channel 0
        d_map = lambda pi, j: (0, ch_blocks + pi * tpc + j, 0)   # channel 1
        stat_map = lambda pi, j: (pi, 0, 0, 0)
        stat_spec = pl.BlockSpec((None, B, 1, 1), stat_map)
        stat_shape = jax.ShapeDtypeStruct((P, B, 1, 1), jnp.float32)

        neg, cls_p, cnt_p, psum_p = pl.pallas_call(
            _textloss_kernel,
            out_shape=(jax.ShapeDtypeStruct((B, R, _LANE), jnp.float32),
                       stat_shape, stat_shape, stat_shape),
            grid=(P, tpc),
            in_specs=[pl.BlockSpec(blk, p_map),
                      pl.BlockSpec(blk, d_map),
                      pl.BlockSpec(blk, plane_map),
                      pl.BlockSpec(blk, plane_map),
                      pl.BlockSpec(blk, plane_map)],
            out_specs=(pl.BlockSpec(blk, plane_map),
                       stat_spec, stat_spec, stat_spec),
            scratch_shapes=[pltpu.VMEM(blk, jnp.float32)] * 3,
            compiler_params=pltpu.CompilerParams(
                dimension_semantics=("parallel", "arbitrary"),
                vmem_limit_bytes=vmem_limit),
            cost_estimate=cost,
        )(fy_rows, fy_rows, tm_rows, trm_rows, di_rows)
        neg = neg.reshape(B, N)
    else:
        # ------- fallback: (B, TN) blocks (small or unaligned H*W) ----------
        if lane_aligned:
            tn_cap = max(_LANE,
                         (stream_budget // (B * vmem_per_elem)) // _LANE * _LANE)
            TN = _largest_divisor(N, _LANE, tn_cap)
            fy_flat = fy_preds.reshape(B, C * N)       # free reshape
            p_arr, d_arr = fy_flat, fy_flat
            ch_blocks = N // TN
        else:
            # Non-lane-aligned N: single full-extent block (rare / small case).
            TN = N
            p_arr = fy_preds[:, 0, :, :].reshape(B, N)
            d_arr = fy_preds[:, 1, :, :].reshape(B, N)
            ch_blocks = 0
        tiles = N // TN
        P = n_cores if (n_cores > 1 and tiles % n_cores == 0) else 1
        tpc = tiles // P

        plane_map = lambda pi, j: (0, pi * tpc + j)
        p_map = plane_map
        d_map = ((lambda pi, j: (0, ch_blocks + pi * tpc + j))
                 if lane_aligned else plane_map)
        stat_map = lambda pi, j: (pi, 0, 0)
        stat_spec = pl.BlockSpec((None, B, 1), stat_map)
        stat_shape = jax.ShapeDtypeStruct((P, B, 1), jnp.float32)
        blk = (B, TN)

        neg, cls_p, cnt_p, psum_p = pl.pallas_call(
            _textloss_kernel,
            out_shape=(jax.ShapeDtypeStruct((B, N), jnp.float32),
                       stat_shape, stat_shape, stat_shape),
            grid=(P, tpc),
            in_specs=[pl.BlockSpec(blk, p_map),
                      pl.BlockSpec(blk, d_map),
                      pl.BlockSpec(blk, plane_map),
                      pl.BlockSpec(blk, plane_map),
                      pl.BlockSpec(blk, plane_map)],
            out_specs=(pl.BlockSpec(blk, plane_map),
                       stat_spec, stat_spec, stat_spec),
            scratch_shapes=[pltpu.VMEM(blk, jnp.float32)] * 3,
            compiler_params=pltpu.CompilerParams(
                dimension_semantics=("parallel", "arbitrary"),
                vmem_limit_bytes=vmem_limit),
            cost_estimate=cost,
        )(p_arr, d_arr, tmask, trmask, dist)

    cls_sum = jnp.sum(cls_p)
    pos_cnt = jnp.sum(cnt_p, axis=0).reshape(B)
    pos_sum = jnp.sum(psum_p, axis=0).reshape(B)
    return neg, cls_sum, pos_cnt, pos_sum


# ---------------------------------------------------------------------------
# OHEM glue (torch TextLoss.single_image_loss), fed by the kernel outputs.
# ---------------------------------------------------------------------------
def _single_image_loss(neg_masked, pos_cnt, pos_sum, N):
    """One descending sort + cumsum answers every branch:
       * npos>0, nneg >= 3*npos : mean of top-(3*npos) negatives
       * npos>0, nneg <  3*npos : mean of all negatives
       * npos==0                : mean of top-100 pre_loss (everything is negative)
    # TODO(synk): the per-image O(N log N) sort could be replaced by an O(N)
    # histogram / threshold-selection Pallas pass for very large H*W.
    """
    B = neg_masked.shape[0]
    k0 = min(100, N)

    neg_sorted = -jnp.sort(-neg_masked, axis=1)      # descending per image
    neg_sorted = jnp.maximum(neg_sorted, 0.0)        # zero the -1 sentinels
    csum = jnp.cumsum(neg_sorted, axis=1)            # csum[:, k-1] = top-k sum

    npos = pos_cnt.astype(jnp.int32)
    nneg = N - npos
    # NOTE: npos>0 and nneg==0 yields nega_loss = 0 where torch would produce
    # NaN (mean of an empty tensor); kept as a deliberate divergence.
    k = jnp.maximum(jnp.minimum(nneg, 3 * npos), 1)
    k = jnp.where(npos > 0, k, k0)
    topk_sum = jnp.take_along_axis(csum, (k - 1)[:, None], axis=1)[:, 0]
    nega_loss = topk_sum / k.astype(jnp.float32)
    posi_loss = jnp.where(npos > 0, pos_sum / jnp.maximum(pos_cnt, 1.0), 0.0)
    return jnp.sum(posi_loss + nega_loss) / B


@jax.jit
def text_loss_forward(fy_preds, train_mask, tr_mask, distance_field):
    """fy_preds: [B, C>=2, H, W] (NCHW); masks / distance_field: [B, H, W].

    Masks may arrive in any dtype (bool / int8 / float); they are streamed
    as-is and cast inside the kernel — no wrapper-side f32 upcasts.
    """
    B, C, H, W = fy_preds.shape
    N = H * W

    tmask = train_mask.reshape(B, N)
    trm = tr_mask.reshape(B, N)
    dist = distance_field.reshape(B, N)

    # TODO(synk): the data-dependent torch fallbacks (all-zero train_mask /
    # all-zero tr_mask / fake-text-region when eps<=5) are host-side Python
    # control flow in the reference and are not reproduced here.

    neg_masked, cls_sum, pos_cnt, pos_sum = _run_kernel(fy_preds, tmask, trm, dist)

    # torch does .mean() over ALL pixels after masking (not a masked mean).
    cls_loss = cls_sum / (B * N)
    dis_loss = _single_image_loss(neg_masked, pos_cnt, pos_sum, N)

    zero = jnp.float32(0.0)
    total = ALPHA * cls_loss + BETA * dis_loss
    return {
        "total_loss": total,
        "cls_loss": ALPHA * cls_loss,
        "distance_loss": BETA * dis_loss,
        "dir_loss": zero,
        "norm_loss": zero,
        "angle_loss": zero,
        "point_loss": zero,
        "energy_loss": zero,
        "embed_loss": zero,
    }


# ---------------------------------------------------------------------------
# NumPy reference (mirrors the torch forward) for the smoke test.
# ---------------------------------------------------------------------------
def _reference_loss(fy_preds, train_mask, tr_mask, distance_field):
    fy = np.asarray(fy_preds, np.float64)
    tm = np.asarray(train_mask, np.float64)
    conf = (np.asarray(tr_mask) > 0).astype(np.float64)
    dist = np.asarray(distance_field, np.float64)
    prob, dpred = fy[:, 0], fy[:, 1]
    bce = -(conf * np.maximum(np.log(prob), -100.0)
            + (1.0 - conf) * np.maximum(np.log(1.0 - prob), -100.0))
    cls_loss = (bce * tm).mean()
    pre = (dpred - dist) ** 2 * tm
    B = fy.shape[0]
    s = 0.0
    for i in range(B):
        p = pre[i].reshape(-1)
        lab = dist[i].reshape(-1)
        posm = lab >= EPS_LABEL
        npos = int(posm.sum())
        if npos > 0:
            s += p[posm].mean()
            negs = p[~posm]
            if len(negs) < 3 * npos:
                s += negs.mean()
            else:
                s += np.sort(negs)[::-1][:3 * npos].mean()
        else:
            s += np.sort(p)[::-1][:min(100, p.size)].mean()
    dis_loss = s / B
    return float(ALPHA * cls_loss + BETA * dis_loss)


if __name__ == "__main__":
    B, C, H, W = 2, 4, 16, 16
    key = jax.random.PRNGKey(0)
    k1, k2, k3, k4 = jax.random.split(key, 4)

    fy_raw = jax.random.normal(k1, (B, C, H, W), dtype=jnp.float32)
    # channel 0 must be a probability (torch BCELoss expects inputs in (0, 1))
    fy_preds = fy_raw.at[:, 0].set(jax.nn.sigmoid(fy_raw[:, 0]))

    train_mask = (jax.random.uniform(k2, (B, H, W)) > 0.3).astype(jnp.float32)
    tr_mask = (jax.random.uniform(k3, (B, H, W)) > 0.5).astype(jnp.int32)
    u = jax.random.uniform(k4, (B, H, W), dtype=jnp.float32)
    # image 0: many positives (mean-of-all-negatives branch);
    # image 1: few positives (top-(3*npos) negatives branch)
    thresh = jnp.array([0.5, 0.9], dtype=jnp.float32)[:, None, None]
    distance_field = jnp.where(u > thresh, u, 0.0)

    out = text_loss_forward(fy_preds, train_mask, tr_mask, distance_field)
    jax.block_until_ready(out)

    got = float(out["total_loss"])
    ref = _reference_loss(fy_preds, train_mask, tr_mask, distance_field)
    assert np.isfinite(got)
    assert abs(got - ref) <= 1e-3 * max(1.0, abs(ref)), (got, ref)
    print("KERNEL_OK")
</pallas_src>

<mosaic_0001>
module attributes {stable_mosaic.version = 11 : i64} {
  func.func @_textloss_kernel(%arg0: i32, %arg1: i32, %arg2: memref<2x256xf32, #tpu.memory_space<vmem>>, %arg3: memref<2x256xf32, #tpu.memory_space<vmem>>, %arg4: memref<2x256xf32, #tpu.memory_space<vmem>>, %arg5: memref<2x256xi32, #tpu.memory_space<vmem>>, %arg6: memref<2x256xf32, #tpu.memory_space<vmem>>, %arg7: memref<2x256xf32, #tpu.memory_space<vmem>>, %arg8: memref<1x2x1xf32, #tpu.memory_space<vmem>>, %arg9: memref<1x2x1xf32, #tpu.memory_space<vmem>>, %arg10: memref<1x2x1xf32, #tpu.memory_space<vmem>>, %arg11: memref<2x256xf32, #tpu.memory_space<vmem>>, %arg12: memref<2x256xf32, #tpu.memory_space<vmem>>, %arg13: memref<2x256xf32, #tpu.memory_space<vmem>>) attributes {dimension_semantics = [#tpu.dimension_semantics<parallel>, #tpu.dimension_semantics<arbitrary>], iteration_bounds = array<i64: 1, 1>, scalar_prefetch = 0 : i64, scratch_operands = 3 : i64, tpu.core_type = #tpu.core_type<tc>, window_params = [{transform_indices = @transform_0, window_bounds = array<i64: 2, 256>}, {transform_indices = @transform_1, window_bounds = array<i64: 2, 256>}, {transform_indices = @transform_2, window_bounds = array<i64: 2, 256>}, {transform_indices = @transform_3, window_bounds = array<i64: 2, 256>}, {transform_indices = @transform_4, window_bounds = array<i64: 2, 256>}, {transform_indices = @transform_5, window_bounds = array<i64: 2, 256>}, {transform_indices = @transform_6, window_bounds = array<i64: 1, 2, 1>}, {transform_indices = @transform_7, window_bounds = array<i64: 1, 2, 1>}, {transform_indices = @transform_8, window_bounds = array<i64: 1, 2, 1>}]} {
    %c0_i32 = arith.constant 0 : i32
    %0 = arith.cmpi eq, %arg1, %c0_i32 : i32
    %1 = arith.extui %0 : i1 to i32
    %c0_i32_0 = arith.constant 0 : i32
    %2 = arith.cmpi ne, %1, %c0_i32_0 : i32
    scf.if %2 {
      %cst_31 = arith.constant 0.000000e+00 : f32
      %42 = vector.broadcast %cst_31 : f32 to vector<2x256xf32>
      %c0_32 = arith.constant 0 : index
      %c0_33 = arith.constant 0 : index
      %43 = vector.load %arg11[%c0_32, %c0_33] : memref<2x256xf32, #tpu.memory_space<vmem>>, vector<2x256xf32>
      tpu.vector_store %arg11[%c0_32, %c0_33], %42 {strides = array<i32>} : memref<2x256xf32, #tpu.memory_space<vmem>>, vector<2x256xf32>,
      %cst_34 = arith.constant 0.000000e+00 : f32
      %44 = vector.broadcast %cst_34 : f32 to vector<2x256xf32>
      %c0_35 = arith.constant 0 : index
      %c0_36 = arith.constant 0 : index
      %45 = vector.load %arg12[%c0_35, %c0_36] : memref<2x256xf32, #tpu.memory_space<vmem>>, vector<2x256xf32>
      tpu.vector_store %arg12[%c0_35, %c0_36], %44 {strides = array<i32>} : memref<2x256xf32, #tpu.memory_space<vmem>>, vector<2x256xf32>,
      %cst_37 = arith.constant 0.000000e+00 : f32
      %46 = vector.broadcast %cst_37 : f32 to vector<2x256xf32>
      %c0_38 = arith.constant 0 : index
      %c0_39 = arith.constant 0 : index
      %47 = vector.load %arg13[%c0_38, %c0_39] : memref<2x256xf32, #tpu.memory_space<vmem>>, vector<2x256xf32>
      tpu.vector_store %arg13[%c0_38, %c0_39], %46 {strides = array<i32>} : memref<2x256xf32, #tpu.memory_space<vmem>>, vector<2x256xf32>,
    } else {
    }
    %c0 = arith.constant 0 : index
    %c0_1 = arith.constant 0 : index
    %3 = vector.load %arg2[%c0, %c0_1] : memref<2x256xf32, #tpu.memory_space<vmem>>, vector<2x256xf32>
    %c0_2 = arith.constant 0 : index
    %c0_3 = arith.constant 0 : index
    %4 = vector.load %arg3[%c0_2, %c0_3] : memref<2x256xf32, #tpu.memory_space<vmem>>, vector<2x256xf32>
    %c0_4 = arith.constant 0 : index
    %c0_5 = arith.constant 0 : index
    %5 = vector.load %arg4[%c0_4, %c0_5] : memref<2x256xf32, #tpu.memory_space<vmem>>, vector<2x256xf32>
    %c0_6 = arith.constant 0 : index
    %c0_7 = arith.constant 0 : index
    %6 = vector.load %arg5[%c0_6, %c0_7] : memref<2x256xi32, #tpu.memory_space<vmem>>, vector<2x256xi32>
    %c0_i32_8 = arith.constant 0 : i32
    %7 = vector.broadcast %c0_i32_8 : i32 to vector<2x256xi32>
    %8 = arith.cmpi sgt, %6, %7 : vector<2x256xi32>
    %c0_9 = arith.constant 0 : index
    %c0_10 = arith.constant 0 : index
    %9 = vector.load %arg6[%c0_9, %c0_10] : memref<2x256xf32, #tpu.memory_space<vmem>>, vector<2x256xf32>
    %cst = arith.constant 1.000000e+00 : f32
    %10 = vector.broadcast %cst : f32 to vector<2x256xf32>
    %11 = arith.subf %10, %3 : vector<2x256xf32>
    %12 = arith.select %8, %3, %11 : vector<2x256xi1>, vector<2x256xf32>
    %13 = math.log %12 : vector<2x256xf32>
    %cst_11 = arith.constant -1.000000e+02 : f32
    %14 = vector.broadcast %cst_11 : f32 to vector<2x256xf32>
    %15 = arith.maximumf %13, %14 : vector<2x256xf32>
    %cst_12 = arith.constant 0.000000e+00 : f32
    %16 = vector.broadcast %cst_12 : f32 to vector<2x256xf32>
    %17 = arith.subf %16, %15 : vector<2x256xf32>
    %18 = arith.subf %4, %9 : vector<2x256xf32>
    %19 = arith.mulf %18, %18 : vector<2x256xf32>
    %20 = arith.mulf %19, %5 : vector<2x256xf32>
    %cst_13 = arith.constant 1.000000e-03 : f32
    %21 = vector.broadcast %cst_13 : f32 to vector<2x256xf32>
    %22 = arith.cmpf oge, %9, %21 : vector<2x256xf32>
    %23 = arith.extui %22 : vector<2x256xi1> to vector<2x256xi32>
    %24 = arith.sitofp %23 : vector<2x256xi32> to vector<2x256xf32>
    %cst_14 = arith.constant -1.000000e+00 : f32
    %25 = vector.broadcast %cst_14 : f32 to vector<2x256xf32>
    %26 = arith.select %22, %25, %20 : vector<2x256xi1>, vector<2x256xf32>
    %c0_15 = arith.constant 0 : index
    %c0_16 = arith.constant 0 : index
    %27 = vector.load %arg7[%c0_15, %c0_16] : memref<2x256xf32, #tpu.memory_space<vmem>>, vector<2x256xf32>
    tpu.vector_store %arg7[%c0_15, %c0_16], %26 {strides = array<i32>} : memref<2x256xf32, #tpu.memory_space<vmem>>, vector<2x256xf32>,
    %c0_17 = arith.constant 0 : index
    %c0_18 = arith.constant 0 : index
    %28 = vector.load %arg11[%c0_17, %c0_18] : memref<2x256xf32, #tpu.memory_space<vmem>>, vector<2x256xf32>
    %29 = arith.mulf %17, %5 : vector<2x256xf32>
    %30 = arith.addf %28, %29 : vector<2x256xf32>
    %c0_19 = arith.constant 0 : index
    %c0_20 = arith.constant 0 : index
    %31 = vector.load %arg11[%c0_19, %c0_20] : memref<2x256xf32, #tpu.memory_space<vmem>>, vector<2x256xf32>
    tpu.vector_store %arg11[%c0_19, %c0_20], %30 {strides = array<i32>} : memref<2x256xf32, #tpu.memory_space<vmem>>, vector<2x256xf32>,
    %c0_21 = arith.constant 0 : index
    %c0_22 = arith.constant 0 : index
    %32 = vector.load %arg12[%c0_21, %c0_22] : memref<2x256xf32, #tpu.memory_space<vmem>>, vector<2x256xf32>
    %33 = arith.addf %32, %24 : vector<2x256xf32>
    %c0_23 = arith.constant 0 : index
    %c0_24 = arith.constant 0 : index
    %34 = vector.load %arg12[%c0_23, %c0_24] : memref<2x256xf32, #tpu.memory_space<vmem>>, vector<2x256xf32>
    tpu.vector_store %arg12[%c0_23, %c0_24], %33 {strides = array<i32>} : memref<2x256xf32, #tpu.memory_space<vmem>>, vector<2x256xf32>,
    %c0_25 = arith.constant 0 : index
    %c0_26 = arith.constant 0 : index
    %35 = vector.load %arg13[%c0_25, %c0_26] : memref<2x256xf32, #tpu.memory_space<vmem>>, vector<2x256xf32>
    %36 = arith.mulf %20, %24 : vector<2x256xf32>
    %37 = arith.addf %35, %36 : vector<2x256xf32>
    %c0_27 = arith.constant 0 : index
    %c0_28 = arith.constant 0 : index
    %38 = vector.load %arg13[%c0_27, %c0_28] : memref<2x256xf32, #tpu.memory_space<vmem>>, vector<2x256xf32>
    tpu.vector_store %arg13[%c0_27, %c0_28], %37 {strides = array<i32>} : memref<2x256xf32, #tpu.memory_space<vmem>>, vector<2x256xf32>,
    %c0_i32_29 = arith.constant 0 : i32
    %39 = arith.cmpi eq, %arg1, %c0_i32_29 : i32
    %40 = arith.extui %39 : i1 to i32
    %c0_i32_30 = arith.constant 0 : i32
    %41 = arith.cmpi ne, %40, %c0_i32_30 : i32
    scf.if %41 {
      %c0_31 = arith.constant 0 : index
      %c0_32 = arith.constant 0 : index
      %42 = vector.load %arg11[%c0_31, %c0_32] : memref<2x256xf32, #tpu.memory_space<vmem>>, vector<2x256xf32>
      %cst_33 = arith.constant dense<0.000000e+00> : vector<2xf32>
      %43 = vector.multi_reduction <add>, %42, %cst_33 [1] : vector<2x256xf32> to vector<2xf32>
      %44 = vector.shape_cast %43 : vector<2xf32> to vector<2x1xf32>
      %c0_34 = arith.constant 0 : index
      %c0_35 = arith.constant 0 : index
      %c0_36 = arith.constant 0 : index
      %45 = vector.load %arg8[%c0_34, %c0_35, %c0_36] : memref<1x2x1xf32, #tpu.memory_space<vmem>>, vector<1x2x1xf32>
      %46 = vector.shape_cast %45 : vector<1x2x1xf32> to vector<2x1xf32>
      %47 = vector.shape_cast %44 : vector<2x1xf32> to vector<1x2x1xf32>
      tpu.vector_store %arg8[%c0_34, %c0_35, %c0_36], %47 {strides = array<i32>} : memref<1x2x1xf32, #tpu.memory_space<vmem>>, vector<1x2x1xf32>,
      %c0_37 = arith.constant 0 : index
      %c0_38 = arith.constant 0 : index
      %48 = vector.load %arg12[%c0_37, %c0_38] : memref<2x256xf32, #tpu.memory_space<vmem>>, vector<2x256xf32>
      %cst_39 = arith.constant dense<0.000000e+00> : vector<2xf32>
      %49 = vector.multi_reduction <add>, %48, %cst_39 [1] : vector<2x256xf32> to vector<2xf32>
      %50 = vector.shape_cast %49 : vector<2xf32> to vector<2x1xf32>
      %c0_40 = arith.constant 0 : index
      %c0_41 = arith.constant 0 : index
      %c0_42 = arith.constant 0 : index
      %51 = vector.load %arg9[%c0_40, %c0_41, %c0_42] : memref<1x2x1xf32, #tpu.memory_space<vmem>>, vector<1x2x1xf32>
      %52 = vector.shape_cast %51 : vector<1x2x1xf32> to vector<2x1xf32>
      %53 = vector.shape_cast %50 : vector<2x1xf32> to vector<1x2x1xf32>
      tpu.vector_store %arg9[%c0_40, %c0_41, %c0_42], %53 {strides = array<i32>} : memref<1x2x1xf32, #tpu.memory_space<vmem>>, vector<1x2x1xf32>,
      %c0_43 = arith.constant 0 : index
      %c0_44 = arith.constant 0 : index
      %54 = vector.load %arg13[%c0_43, %c0_44] : memref<2x256xf32, #tpu.memory_space<vmem>>, vector<2x256xf32>
      %cst_45 = arith.constant dense<0.000000e+00> : vector<2xf32>
      %55 = vector.multi_reduction <add>, %54, %cst_45 [1] : vector<2x256xf32> to vector<2xf32>
      %56 = vector.shape_cast %55 : vector<2xf32> to vector<2x1xf32>
      %c0_46 = arith.constant 0 : index
      %c0_47 = arith.constant 0 : index
      %c0_48 = arith.constant 0 : index
      %57 = vector.load %arg10[%c0_46, %c0_47, %c0_48] : memref<1x2x1xf32, #tpu.memory_space<vmem>>, vector<1x2x1xf32>
      %58 = vector.shape_cast %57 : vector<1x2x1xf32> to vector<2x1xf32>
      %59 = vector.shape_cast %56 : vector<2x1xf32> to vector<1x2x1xf32>
      tpu.vector_store %arg10[%c0_46, %c0_47, %c0_48], %59 {strides = array<i32>} : memref<1x2x1xf32, #tpu.memory_space<vmem>>, vector<1x2x1xf32>,
    } else {
    }
    return
  }
  func.func @transform_0(%arg0: i32, %arg1: i32) -> (i32, i32) {
    %c1_i32 = arith.constant 1 : i32
    %0 = arith.muli %arg0, %c1_i32 : i32
    %1 = arith.addi %0, %arg1 : i32
    %c0_i32 = arith.constant 0 : i32
    %c0_i32_0 = arith.constant 0 : i32
    return %c0_i32, %1 : i32, i32
  }
  func.func @transform_1(%arg0: i32, %arg1: i32) -> (i32, i32) {
    %c1_i32 = arith.constant 1 : i32
    %0 = arith.muli %arg0, %c1_i32 : i32
    %c1_i32_0 = arith.constant 1 : i32
    %1 = arith.addi %c1_i32_0, %0 : i32
    %2 = arith.addi %1, %arg1 : i32
    %c0_i32 = arith.constant 0 : i32
    %c0_i32_1 = arith.constant 0 : i32
    return %c0_i32, %2 : i32, i32
  }
  func.func @transform_2(%arg0: i32, %arg1: i32) -> (i32, i32) {
    %c1_i32 = arith.constant 1 : i32
    %0 = arith.muli %arg0, %c1_i32 : i32
    %1 = arith.addi %0, %arg1 : i32
    %c0_i32 = arith.constant 0 : i32
    %c0_i32_0 = arith.constant 0 : i32
    return %c0_i32, %1 : i32, i32
  }
  func.func @transform_3(%arg0: i32, %arg1: i32) -> (i32, i32) {
    %c1_i32 = arith.constant 1 : i32
    %0 = arith.muli %arg0, %c1_i32 : i32
    %1 = arith.addi %0, %arg1 : i32
    %c0_i32 = arith.constant 0 : i32
    %c0_i32_0 = arith.constant 0 : i32
    return %c0_i32, %1 : i32, i32
  }
  func.func @transform_4(%arg0: i32, %arg1: i32) -> (i32, i32) {
    %c1_i32 = arith.constant 1 : i32
    %0 = arith.muli %arg0, %c1_i32 : i32
    %1 = arith.addi %0, %arg1 : i32
    %c0_i32 = arith.constant 0 : i32
    %c0_i32_0 = arith.constant 0 : i32
    return %c0_i32, %1 : i32, i32
  }
  func.func @transform_5(%arg0: i32, %arg1: i32) -> (i32, i32) {
    %c1_i32 = arith.constant 1 : i32
    %0 = arith.muli %arg0, %c1_i32 : i32
    %1 = arith.addi %0, %arg1 : i32
    %c0_i32 = arith.constant 0 : i32
    %c0_i32_0 = arith.constant 0 : i32
    return %c0_i32, %1 : i32, i32
  }
  func.func @transform_6(%arg0: i32, %arg1: i32) -> (i32, i32, i32) {
    %c0_i32 = arith.constant 0 : i32
    %c0_i32_0 = arith.constant 0 : i32
    %c0_i32_1 = arith.constant 0 : i32
    return %arg0, %c0_i32, %c0_i32_0 : i32, i32, i32
  }
  func.func @transform_7(%arg0: i32, %arg1: i32) -> (i32, i32, i32) {
    %c0_i32 = arith.constant 0 : i32
    %c0_i32_0 = arith.constant 0 : i32
    %c0_i32_1 = arith.constant 0 : i32
    return %arg0, %c0_i32, %c0_i32_0 : i32, i32, i32
  }
  func.func @transform_8(%arg0: i32, %arg1: i32) -> (i32, i32, i32) {
    %c0_i32 = arith.constant 0 : i32
    %c0_i32_0 = arith.constant 0 : i32
    %c0_i32_1 = arith.constant 0 : i32
    return %arg0, %c0_i32, %c0_i32_0 : i32, i32, i32
  }
}

</mosaic_0001>

<llo_original>
// kernel: neg.2
$region0: #{neg.2}
  #allocation0 [shape = 's32[1]{0}', space=sflag, size = 0x4, scoped, tag = 'scoped memory for neg.2']
  %s0 = inlined_call_operand.vmem [shape: f32[2,256], index: 0, kind: input, shape index: {}]
  %s1 = inlined_call_operand.vmem [shape: f32[2,256], index: 1, kind: output, shape index: {}]
  %v2 = vld [vmem:[%s0] sm:$0x3]
  %3 = xla_tuple %v2
  %4 = xla_tuple %3
  %v5 = vxor.u32 %v2, 2147483648
  %6 = xla_tuple %v5
  %7 = vst [vmem:[%s1] sm:$0x3] %v5
  %s8 = scalar_lea.vmem %s0, 2
  %v9 = vld [vmem:[%s8] sm:$0x3]
  %10 = xla_tuple %v9
  %11 = xla_tuple %10
  %v12 = vxor.u32 %v9, 2147483648
  %13 = xla_tuple %v12
  %s14 = scalar_lea.vmem %s1, 2
  %15 = vst [vmem:[%s14] sm:$0x3] %v12

// kernel: text_loss_forward.1
$region0: #{text_loss_forward.1}
  #allocation0 [shape = 'u32[]', space=smem, size = 0x4, offset = 0x4, fixed_abs, tag = 'smem constant byte address 0x4 - core index']
  #allocation1 [shape = 'u32[144,128]{1,0:T(1,128)}', space=vmem, size = 0x12000, scoped, tag = 'internal scratch']
  #allocation2 [shape = 'f32[2,256]{1,0:T(2,128)}', space=vmem, size = 0x800, scoped, tag = 'scratch operand']
  #allocation3 [shape = 'f32[2,256]{1,0:T(2,128)}', space=vmem, size = 0x800, scoped, tag = 'scratch operand']
  #allocation4 [shape = 'f32[2,256]{1,0:T(2,128)}', space=vmem, size = 0x800, scoped, tag = 'scratch operand']
  %s0 = inlined_call_operand.vmem [shape: f32[2,1024], index: 0, kind: input, shape index: {}, may-alias: {0,1}]
  %s1 = inlined_call_operand.vmem [shape: f32[2,1024], index: 1, kind: input, shape index: {}, may-alias: {0,1}]
  %s2 = inlined_call_operand.vmem [shape: f32[2,256], index: 2, kind: input, shape index: {}]
  %s3 = inlined_call_operand.vmem [shape: s32[2,256], index: 3, kind: input, shape index: {}]
  %s4 = inlined_call_operand.vmem [shape: f32[2,256], index: 4, kind: input, shape index: {}]
  %s5 = inlined_call_operand.vmem [shape: f32[2,256], index: 5, kind: output, shape index: {0}]
  %s6 = inlined_call_operand.vmem [shape: f32[1,2,1], index: 6, kind: output, shape index: {1}]
  %s7 = inlined_call_operand.vmem [shape: f32[1,2,1], index: 7, kind: output, shape index: {2}]
  %s8 = inlined_call_operand.vmem [shape: f32[1,2,1], index: 8, kind: output, shape index: {3}]
  %9 = xla_tuple %s5, %s6, %s7, %s8
  %s10 = sld [smem:[#allocation0]]
  $region62: #{text_loss_forward.1} parent=0
    _
  %s12 = ssub.s32 1, %s10
  %s13 = scalar_select 0, %s12, %s10
  // Predicated region
  $region2: #{text_loss_forward.1} parent=0 // pred_check
    _
  $region3: #{text_loss_forward.1} parent=0 // pred_check_branch
    %15 = sbr.rel (0) target = $region5
  $region4: #{text_loss_forward.1} parent=0 // pred_region
    %s16 = sadd.s32 0, 0
    %s17 = smul.u32 2, %s16
    %p18 = scmp.lt.s32.totalorder %s17, 7
    %s19 = scalar_select %p18, %s17, 7
    %s20 = smul.addr %s19, 2
    %s21 = scalar_lea.vmem %s0, %s20
    %s22 = sadd.s32 0, 0
    %s23 = smul.u32 2, %s22
  $region5: #{text_loss_forward.1} parent=0 // pred_fallthru
    _
  // Predicated region
  $region6: #{text_loss_forward.1} parent=0 // pred_check
    _
  $region7: #{text_loss_forward.1} parent=0 // pred_check_branch
    %25 = sbr.rel (0) target = $region9
  $region8: #{text_loss_forward.1} parent=0 // pred_region
    %s26 = sadd.s32 0, 1
    %s27 = sadd.s32 %s26, 0
    %s28 = smul.u32 2, %s27
    %p29 = scmp.lt.s32.totalorder %s28, 7
    %s30 = scalar_select %p29, %s28, 7
    %s31 = smul.addr %s30, 2
    %s32 = scalar_lea.vmem %s1, %s31
    %s33 = sadd.s32 0, 1
    %s34 = sadd.s32 %s33, 0
    %s35 = smul.u32 2, %s34
  $region9: #{text_loss_forward.1} parent=0 // pred_fallthru
    _
  // Predicated region
  $region10: #{text_loss_forward.1} parent=0 // pred_check
    _
  $region11: #{text_loss_forward.1} parent=0 // pred_check_branch
    %37 = sbr.rel (0) target = $region13
  $region12: #{text_loss_forward.1} parent=0 // pred_region
    %s38 = sadd.s32 0, 0
    %s39 = smul.u32 2, %s38
    %p40 = scmp.lt.s32.totalorder %s39, 1
    %s41 = scalar_select %p40, %s39, 1
    %s42 = smul.addr %s41, 2
    %s43 = scalar_lea.vmem %s2, %s42
    %s44 = sadd.s32 0, 0
    %s45 = smul.u32 2, %s44
  $region13: #{text_loss_forward.1} parent=0 // pred_fallthru
    _
  // Predicated region
  $region14: #{text_loss_forward.1} parent=0 // pred_check
    _
  $region15: #{text_loss_forward.1} parent=0 // pred_check_branch
    %47 = sbr.rel (0) target = $region17
  $region16: #{text_loss_forward.1} parent=0 // pred_region
    %s48 = sadd.s32 0, 0
    %s49 = smul.u32 2, %s48
    %p50 = scmp.lt.s32.totalorder %s49, 1
    %s51 = scalar_select %p50, %s49, 1
    %s52 = smul.addr %s51, 2
    %s53 = scalar_lea.vmem %s3, %s52
    %s54 = sadd.s32 0, 0
    %s55 = smul.u32 2, %s54
  $region17: #{text_loss_forward.1} parent=0 // pred_fallthru
    _
  // Predicated region
  $region18: #{text_loss_forward.1} parent=0 // pred_check
    _
  $region19: #{text_loss_forward.1} parent=0 // pred_check_branch
    %57 = sbr.rel (0) target = $region21
  $region20: #{text_loss_forward.1} parent=0 // pred_region
    %s58 = sadd.s32 0, 0
    %s59 = smul.u32 2, %s58
    %p60 = scmp.lt.s32.totalorder %s59, 1
    %s61 = scalar_select %p60, %s59, 1
    %s62 = smul.addr %s61, 2
    %s63 = scalar_lea.vmem %s4, %s62
    %s64 = sadd.s32 0, 0
    %s65 = smul.u32 2, %s64
  $region21: #{text_loss_forward.1} parent=0 // pred_fallthru
    _
  %s66 = sadd.s32 0, 0
  %s67 = smul.u32 2, %s66
  %p68 = scmp.lt.s32.totalorder %s67, 7
  %s69 = scalar_select %p68, %s67, 7
  %s70 = smul.addr %s69, 2
  %s71 = scalar_lea.vmem %s0, %s70
  %s72 = sadd.s32 0, 1
  %s73 = sadd.s32 %s72, 0
  %s74 = smul.u32 2, %s73
  %p75 = scmp.lt.s32.totalorder %s74, 7
  %s76 = scalar_select %p75, %s74, 7
  %s77 = smul.addr %s76, 2
  %s78 = scalar_lea.vmem %s1, %s77
  %s79 = sadd.s32 0, 0
  %s80 = smul.u32 2, %s79
  %p81 = scmp.lt.s32.totalorder %s80, 1
  %s82 = scalar_select %p81, %s80, 1
  %s83 = smul.addr %s82, 2
  %s84 = scalar_lea.vmem %s2, %s83
  %s85 = sadd.s32 0, 0
  %s86 = smul.u32 2, %s85
  %p87 = scmp.lt.s32.totalorder %s86, 1
  %s88 = scalar_select %p87, %s86, 1
  %s89 = smul.addr %s88, 2
  %s90 = scalar_lea.vmem %s3, %s89
  %s91 = sadd.s32 0, 0
  %s92 = smul.u32 2, %s91
  %p93 = scmp.lt.s32.totalorder %s92, 1
  %s94 = scalar_select %p93, %s92, 1
  %s95 = smul.addr %s94, 2
  %s96 = scalar_lea.vmem %s4, %s95
  %s97 = sadd.s32 0, 0
  %s98 = smul.u32 2, %s97
  %p99 = scmp.lt.s32.totalorder %s98, 1
  %s100 = scalar_select %p99, %s98, 1
  %s101 = smul.addr %s100, 2
  %s102 = scalar_lea.vmem %s5, %s101
  %s103 = sadd.s32 0, 0
  %s104 = smul.u32 2, %s103
  %p105 = scmp.lt.s32.totalorder %s104, 7
  %s106 = scalar_select %p105, %s104, 7
  %s107 = smul.addr %s106, 2
  %s108 = scalar_lea.vmem %s0, %s107
  %s109 = sadd.s32 0, 0
  %s110 = smul.u32 2, %s109
  %s111 = sadd.s32 0, 1
  %s112 = sadd.s32 %s111, 0
  %s113 = smul.u32 2, %s112
  %p114 = scmp.lt.s32.totalorder %s113, 7
  %s115 = scalar_select %p114, %s113, 7
  %s116 = smul.addr %s115, 2
  %s117 = scalar_lea.vmem %s1, %s116
  %s118 = sadd.s32 0, 1
  %s119 = sadd.s32 %s118, 0
  %s120 = smul.u32 2, %s119
  %s121 = sadd.s32 0, 0
  %s122 = smul.u32 2, %s121
  %p123 = scmp.lt.s32.totalorder %s122, 1
  %s124 = scalar_select %p123, %s122, 1
  %s125 = smul.addr %s124, 2
  %s126 = scalar_lea.vmem %s2, %s125
  %s127 = sadd.s32 0, 0
  %s128 = smul.u32 2, %s127
  %s129 = sadd.s32 0, 0
  %s130 = smul.u32 2, %s129
  %p131 = scmp.lt.s32.totalorder %s130, 1
  %s132 = scalar_select %p131, %s130, 1
  %s133 = smul.addr %s132, 2
  %s134 = scalar_lea.vmem %s3, %s133
  %s135 = sadd.s32 0, 0
  %s136 = smul.u32 2, %s135
  %s137 = sadd.s32 0, 0
  %s138 = smul.u32 2, %s137
  %p139 = scmp.lt.s32.totalorder %s138, 1
  %s140 = scalar_select %p139, %s138, 1
  %s141 = smul.addr %s140, 2
  %s142 = scalar_lea.vmem %s4, %s141
  %s143 = sadd.s32 0, 0
  %s144 = smul.u32 2, %s143
  %s145 = sadd.s32 0, 0
  %s146 = smul.u32 2, %s145
  %p147 = scmp.lt.s32.totalorder %s146, 1
  %s148 = scalar_select %p147, %s146, 1
  %s149 = smul.addr %s148, 2
  %s150 = scalar_lea.vmem %s5, %s149
  %s151 = sadd.s32 0, 0
  %s152 = smul.u32 2, %s151
  %p153 = scmp.eq.s32.totalorder 0, 0
  // Predicated region
  $region22: #{text_loss_forward.1} parent=0 // pred_check
    %p154 = pneg %p153
  $region23: #{text_loss_forward.1} parent=0 // pred_check_branch
    %156 = sbr.rel (%p154) target = $region25
  $region24: #{text_loss_forward.1} parent=0 // pred_region
    %157 = vst [vmem:[#allocation2] sm:$0xf] 0.0
    %158 = vst [vmem:[#allocation3] sm:$0xf] 0.0
    %159 = vst [vmem:[#allocation4] sm:$0xf] 0.0
  $region25: #{text_loss_forward.1} parent=0 // pred_fallthru
    _
  %v160 = vld [vmem:[%s108] sm:$0xf]
  %v161 = vld [vmem:[%s117] sm:$0xf]
  %v162 = vld [vmem:[%s126] sm:$0xf]
  %v163 = vld [vmem:[%s134] sm:$0xf]
  %vm164 = vcmp.gt.s32.totalorder %v163, 0
  %v165 = vld [vmem:[%s142] sm:$0xf]
  %v166 = vsub.f32 1.0, %v160
  %v167 = vsel %vm164, %v160, %v166
  %v168 = vlog2.pop %v167
  %v169 = vmul.f32 %v168, 0.6931472
  %v170 = vmax.f32 %v169, -100.0
  %v171 = vsub.f32 0.0, %v170
  %v172 = vsub.f32 %v161, %v165
  %v173 = vmul.f32 %v172, %v172
  %v174 = vmul.f32 %v173, %v162
  %vm175 = vcmp.ge.f32.partialorder %v165, 0.001
  %v176 = vsel %vm175, 1, 0
  %v177 = vcvt.s32.f32 %v176
  %v178 = vsel %vm175, -1.0, %v174
  %179 = vst [vmem:[%s150] sm:$0xf] %v178
  %v180 = vld [vmem:[#allocation2] sm:$0xf]
  %v181 = vmul.f32 %v171, %v162
  %v182 = vadd.f32 %v180, %v181
  %183 = vst [vmem:[#allocation2] sm:$0xf] %v182
  %v184 = vld [vmem:[#allocation3] sm:$0xf]
  %v185 = vadd.f32 %v184, %v177
  %186 = vst [vmem:[#allocation3] sm:$0xf] %v185
  %v187 = vld [vmem:[#allocation4] sm:$0xf]
  %v188 = vmul.f32 %v174, %v177
  %v189 = vadd.f32 %v187, %v188
  %190 = vst [vmem:[#allocation4] sm:$0xf] %v189
  // Predicated region
  $region26: #{text_loss_forward.1} parent=0 // pred_check
    %p191 = pneg %p153
  $region27: #{text_loss_forward.1} parent=0 // pred_check_branch
    %193 = sbr.rel (%p191) target = $region29
  $region28: #{text_loss_forward.1} parent=0 // pred_region
    %v194 = vld [vmem:[#allocation2] sm:$0xf]
    %v197 = vunpack.c.l.s4 1983009808
    %v198 = vunpack.c.0.s8 %v197
    %v199 = vlaneseq
    %v200 = vshrl.u32 %v199, 7
    %v201 = vsub.s32 %v198, %v200
    %v202 = vrot.slane %v194, %v201
    %v203 = vcombine.high %v202, %v202
    %vm206 = vcmask 1041408
    %v207 = vsel %vm206, %v202, 0.0
    %v208 = vsel %vm206, %v203, 0.0
    %v209 = vadd.f32 %v207, %v208
    %210 = vadd.xlane.f32.xlu0 %v209
    %v211 = vpop.xlane.xlu0 %210
    %vm212 = vcmask 1024
    %213 = vst.msk [vmem:[%s6] sm:$0x3] %vm212, %v211
    %v214 = vld [vmem:[#allocation3] sm:$0xf]
    %v217 = vunpack.c.l.s4 1983009808
    %v218 = vunpack.c.0.s8 %v217
    %v219 = vlaneseq
    %v220 = vshrl.u32 %v219, 7
    %v221 = vsub.s32 %v218, %v220
    %v222 = vrot.slane %v214, %v221
    %v223 = vcombine.high %v222, %v222
    %v226 = vsel %vm206, %v222, 0.0
    %v227 = vsel %vm206, %v223, 0.0
    %v228 = vadd.f32 %v226, %v227
    %229 = vadd.xlane.f32.xlu0 %v228
    %v230 = vpop.xlane.xlu0 %229
    %231 = vst.msk [vmem:[%s7] sm:$0x3] %vm212, %v230
    %v232 = vld [vmem:[#allocation4] sm:$0xf]
    %v235 = vunpack.c.l.s4 1983009808
    %v236 = vunpack.c.0.s8 %v235
    %v237 = vlaneseq
    %v238 = vshrl.u32 %v237, 7
    %v239 = vsub.s32 %v236, %v238
    %v240 = vrot.slane %v232, %v239
    %v241 = vcombine.high %v240, %v240
    %v244 = vsel %vm206, %v240, 0.0
    %v245 = vsel %vm206, %v241, 0.0
    %v246 = vadd.f32 %v244, %v245
    %247 = vadd.xlane.f32.xlu0 %v246
    %v248 = vpop.xlane.xlu0 %247
    %249 = vst.msk [vmem:[%s8] sm:$0x3] %vm212, %v248
  $region29: #{text_loss_forward.1} parent=0 // pred_fallthru
    _
  %s250 = sadd.s32 0, 0
  %s251 = smul.u32 2, %s250
  %p252 = scmp.lt.s32.totalorder %s251, 1
  %s253 = scalar_select %p252, %s251, 1
  %s254 = smul.addr %s253, 2
  %s255 = scalar_lea.vmem %s5, %s254
  // Predicated region
  $region30: #{text_loss_forward.1} parent=0 // pred_check
    _
  $region31: #{text_loss_forward.1} parent=0 // pred_check_branch
    %257 = sbr.rel (0) target = $region33
  $region32: #{text_loss_forward.1} parent=0 // pred_region
    %s258 = sadd.s32 0, 0
    %s259 = smul.u32 2, %s258
  $region33: #{text_loss_forward.1} parent=0 // pred_fallthru
    _
  // Predicated region
  $region34: #{text_loss_forward.1} parent=0 // pred_check
    _
  $region35: #{text_loss_forward.1} parent=0 // pred_check_branch
    %261 = sbr.rel (0) target = $region37
  $region36: #{text_loss_forward.1} parent=0 // pred_region
    _
  $region37: #{text_loss_forward.1} parent=0 // pred_fallthru
    _
  // Predicated region
  $region38: #{text_loss_forward.1} parent=0 // pred_check
    _
  $region39: #{text_loss_forward.1} parent=0 // pred_check_branch
    %263 = sbr.rel (0) target = $region41
  $region40: #{text_loss_forward.1} parent=0 // pred_region
    _
  $region41: #{text_loss_forward.1} parent=0 // pred_fallthru
    _
  // Predicated region
  $region42: #{text_loss_forward.1} parent=0 // pred_check
    _
  $region43: #{text_loss_forward.1} parent=0 // pred_check_branch
    %265 = sbr.rel (0) target = $region45
  $region44: #{text_loss_forward.1} parent=0 // pred_region
    _
  $region45: #{text_loss_forward.1} parent=0 // pred_fallthru
    _
  // Predicated region
  $region46: #{text_loss_forward.1} parent=0 // pred_check
    _
  $region47: #{text_loss_forward.1} parent=0 // pred_check_branch
    %267 = sbr.rel (0) target = $region49
  $region48: #{text_loss_forward.1} parent=0 // pred_region
    %s268 = sadd.s32 0, 0
    %s269 = smul.u32 2, %s268
    %p270 = scmp.lt.s32.totalorder %s269, 1
    %s271 = scalar_select %p270, %s269, 1
    %s272 = smul.addr %s271, 2
    %s273 = scalar_lea.vmem %s5, %s272
  $region49: #{text_loss_forward.1} parent=0 // pred_fallthru
    _
  // Predicated region
  $region50: #{text_loss_forward.1} parent=0 // pred_check
    _
  $region51: #{text_loss_forward.1} parent=0 // pred_check_branch
    %275 = sbr.rel (0) target = $region53
  $region52: #{text_loss_forward.1} parent=0 // pred_region
    _
  $region53: #{text_loss_forward.1} parent=0 // pred_fallthru
    _
  // Predicated region
  $region54: #{text_loss_forward.1} parent=0 // pred_check
    _
  $region55: #{text_loss_forward.1} parent=0 // pred_check_branch
    %277 = sbr.rel (0) target = $region57
  $region56: #{text_loss_forward.1} parent=0 // pred_region
    _
  $region57: #{text_loss_forward.1} parent=0 // pred_fallthru
    _
  // Predicated region
  $region58: #{text_loss_forward.1} parent=0 // pred_check
    _
  $region59: #{text_loss_forward.1} parent=0 // pred_check_branch
    %279 = sbr.rel (0) target = $region61
  $region60: #{text_loss_forward.1} parent=0 // pred_region
    _
  $region61: #{text_loss_forward.1} parent=0 // pred_fallthru
    _

</llo_original>
